<compile_context>
chip_gen: v6e
topology: v6e:2x2x1
jax: 0.10.0
libtpu: 0.0.40
codegen_flags: <defaults>
</compile_context>

<pallas_src>
from collections import OrderedDict
from functools import partial

import numpy as np
import jax
import jax.numpy as jnp
from jax.experimental import pallas as pl
from jax.experimental.pallas import tpu as pltpu


# ----------------------------------------------------------------------------
# Fused Pallas kernel:
#   conv1(3x3, SAME) + bias  --record-->  ReLU  -->  conv2(3x3, SAME) + bias
# One grid step = B images, laid out as a (B*H, L) slab (lanes = width x chan).
# ----------------------------------------------------------------------------
def _fused_topo_cnn_kernel(x_ref, t1_ref, b1_ref, t2_ref, b2_ref,
                           act1_ref, out_ref, *, img_h):
    # x_ref:    (1, B*H, W*Cin_pad)      input slab (B images stacked on rows)
    # t1_ref:   (3*W*Cin_pad, W*Cmid)    banded conv1 weights (kh-major blocks)
    # b1_ref:   (1, W*Cmid)              conv1 bias tiled over width
    # t2_ref:   (3*W*Cmid, W*Cout)       banded conv2 weights
    # b2_ref:   (1, W*Cout)
    # act1_ref: (1, B*H, W*Cmid)         conv1 output (pre-ReLU) -- hook record
    # out_ref:  (1, B*H, W*Cout)         conv2 output

    def band_conv(slab, t_ref, b_ref):
        # slab: (M, L) with M = B*H rows and lanes = (width, channels).
        M = slab.shape[0]
        rows = jax.lax.broadcasted_iota(jnp.int32, slab.shape, 0)
        row_in_img = rows % img_h
        # kh shifts: sublane rotates (XLU) + zero mask at each image's border
        # (per-image mask so the roll never mixes rows of adjacent images).
        up = jnp.where(row_in_img == 0, 0.0,
                       pltpu.roll(slab, shift=1, axis=0))          # S[h-1]
        down = jnp.where(row_in_img == img_h - 1, 0.0,
                         pltpu.roll(slab, shift=M - 1, axis=0))     # S[h+1]
        # kw taps + width zero-padding are folded into the banded weights.
        # One lane-dense (M, 3L) x (3L, W*Cout) MXU contraction, f32 accum:
        # the MXU accumulates over K = 3L internally (no VALU partial adds).
        lhs = jnp.concatenate([up, slab, down], axis=1)             # (M, 3L)
        acc = jnp.dot(lhs, t_ref[...], preferred_element_type=jnp.float32)
        return acc + b_ref[...]

    x = x_ref[0]                                     # (B*H, W*Cin_pad)
    a1 = band_conv(x, t1_ref, b1_ref)                # (B*H, W*Cmid) pre-ReLU
    act1_ref[0] = a1.astype(act1_ref.dtype)          # lane-dense 128-wide store
    a2 = band_conv(jnp.maximum(a1, 0.0), t2_ref, b2_ref)
    out_ref[0] = a2.astype(out_ref.dtype)            # lane-dense 128-wide store


def fused_two_conv_pallas(x_blk, t1, b1, t2, b2, *, img_h):
    """x_blk: (G, B*H, W*Cin_pad); returns (act1, out) as (G, B*H, L) slabs."""
    G, M, Lin = x_blk.shape
    Lmid = b1.shape[1]
    Lout = b2.shape[1]
    flops = 2 * G * M * (t1.shape[0] * t1.shape[1] + t2.shape[0] * t2.shape[1])
    bytes_accessed = 4 * (x_blk.size + G * M * (Lmid + Lout)
                          + t1.size + t2.size + b1.size + b2.size)
    kernel = partial(_fused_topo_cnn_kernel, img_h=img_h)
    return pl.pallas_call(
        kernel,
        out_shape=(jax.ShapeDtypeStruct((G, M, Lmid), jnp.float32),
                   jax.ShapeDtypeStruct((G, M, Lout), jnp.float32)),
        grid=(G,),
        in_specs=[
            pl.BlockSpec((1, M, Lin), lambda g: (g, 0, 0)),
            pl.BlockSpec(t1.shape, lambda g: (0, 0)),
            pl.BlockSpec(b1.shape, lambda g: (0, 0)),
            pl.BlockSpec(t2.shape, lambda g: (0, 0)),
            pl.BlockSpec(b2.shape, lambda g: (0, 0)),
        ],
        out_specs=(
            pl.BlockSpec((1, M, Lmid), lambda g: (g, 0, 0)),
            pl.BlockSpec((1, M, Lout), lambda g: (g, 0, 0)),
        ),
        compiler_params=pltpu.CompilerParams(
            dimension_semantics=("parallel",)),      # megacore split on v7x
        cost_estimate=pl.CostEstimate(
            flops=flops, transcendentals=0, bytes_accessed=bytes_accessed),
    )(x_blk, t1, b1, t2, b2)


# ----------------------------------------------------------------------------
# Construction-time helpers.
# ----------------------------------------------------------------------------
def conv3x3_to_band_matrix(w_hwio, width):
    """(3,3,Cin,Cout) SAME-pad conv weights -> (3*width*Cin, width*Cout) banded
    matrix: the kw taps and the width zero-padding are folded into a
    block-Toeplitz structure along the width axis, so a 3x3 conv becomes one
    K = 3*width*Cin contraction over [up, center, down] row-shifted slabs."""
    w = np.asarray(w_hwio, dtype=np.float32)
    _, _, cin, cout = w.shape
    t = np.zeros((3, width * cin, width * cout), np.float32)
    for kh in range(3):
        for kw in range(3):
            for wo in range(width):
                wi = wo + kw - 1
                if 0 <= wi < width:
                    t[kh, wi * cin:(wi + 1) * cin,
                      wo * cout:(wo + 1) * cout] = w[kh, kw]
    return jnp.asarray(t.reshape(3 * width * cin, width * cout))


def _pad_cin_for_lanes(cin, width, lane=128):
    """Smallest channel count >= cin such that width*cin is lane-dense."""
    for c in range(cin, cin + lane + 1):
        if (width * c) % lane == 0:
            return c
    return cin


def _choose_block_b(n, target=16):
    """Largest divisor of n that is <= target (images per grid step)."""
    b = 1
    for c in range(1, min(n, target) + 1):
        if n % c == 0:
            b = c
    return b


def hypercube_positions(num_channels, dimension=2):
    num_axis = int(np.ceil(num_channels ** (1.0 / dimension)))
    axes = [jnp.linspace(0.0, 1.0, num_axis)] * dimension
    grid = jnp.stack(jnp.meshgrid(*axes, indexing="ij"), axis=-1)
    return grid.reshape(-1, dimension)[:num_channels]


def inverse_distance(out_channels_dict, dimension=2):
    # TODO(synk): only the default euclidean/hypercube scheme is implemented
    # (norm='l1', position_scheme='nested'/'hypersphere' are not).
    inv = OrderedDict()
    for name, c in out_channels_dict.items():
        pos = hypercube_positions(c, dimension)           # (C, dim)
        diff = pos[:, None, :] - pos[None, :, :]          # (C, C, dim)
        dist = jnp.sqrt(jnp.sum(diff * diff, axis=-1))    # euclidean
        inv[name] = 1.0 / (1.0 + dist)
    return inv


# ----------------------------------------------------------------------------
# jitted functional forward: NCHW in -> (out NCHW, conv1-activation NCHW).
# Activations are returned functionally (no Python side effects under jit).
# NCHW<->NHWC transposes are kept only for API parity with the PyTorch module;
# a slab-native consumer could drop them entirely.
# ----------------------------------------------------------------------------
@partial(jax.jit, static_argnames=("cin_pad", "block_b"))
def _topographic_forward(kernel_params, x_nchw, *, cin_pad, block_b):
    N, Cin, H, W = x_nchw.shape
    t1 = kernel_params["t1"]
    b1 = kernel_params["b1"]
    t2 = kernel_params["t2"]
    b2 = kernel_params["b2"]
    Cmid = b1.shape[1] // W
    Cout = b2.shape[1] // W

    # NCHW -> NHWC (layout copy), lane-pad the channel axis so W*Cin_pad is a
    # multiple of 128, then free reshape to (N//B, B*H, W*Cin_pad) slabs.
    x_nhwc = jnp.transpose(x_nchw, (0, 2, 3, 1))
    if cin_pad > Cin:
        x_nhwc = jnp.pad(x_nhwc, ((0, 0), (0, 0), (0, 0), (0, cin_pad - Cin)))
    G = N // block_b
    x_blk = x_nhwc.reshape(G, block_b * H, W * cin_pad)

    act1_blk, out_blk = fused_two_conv_pallas(x_blk, t1, b1, t2, b2, img_h=H)

    act1 = jnp.transpose(act1_blk.reshape(N, H, W, Cmid), (0, 3, 1, 2))
    out = jnp.transpose(out_blk.reshape(N, H, W, Cout), (0, 3, 1, 2))
    return out, act1


# ----------------------------------------------------------------------------
# TopographicModel equivalent: params, forward, activation recording.
# ----------------------------------------------------------------------------
class TopographicModelPallas:
    def __init__(self, key, in_ch=4, mid_ch=8, out_ch=8,
                 height=16, width=16, dimension=2):
        k1, k2, k3, k4 = jax.random.split(key, 4)
        s1 = (2.0 / (in_ch * 9)) ** 0.5
        s2 = (2.0 / (mid_ch * 9)) ** 0.5
        # Raw conv params (HWIO layout) — the "state_dict" of the base model.
        self.params = {
            "conv1_w": jax.random.normal(k1, (3, 3, in_ch, mid_ch), jnp.float32) * s1,
            "conv1_b": jax.random.normal(k2, (mid_ch,), jnp.float32) * 0.01,
            "conv2_w": jax.random.normal(k3, (3, 3, mid_ch, out_ch), jnp.float32) * s2,
            "conv2_b": jax.random.normal(k4, (out_ch,), jnp.float32) * 0.01,
        }
        self.height, self.width = height, width
        self.in_ch = in_ch
        # Zero-pad Cin so the input slab is lane-dense (W*Cin_pad % 128 == 0).
        self.cin_pad = _pad_cin_for_lanes(in_ch, width)
        w1 = np.asarray(self.params["conv1_w"])
        if self.cin_pad > in_ch:
            w1 = np.pad(w1, ((0, 0), (0, 0), (0, self.cin_pad - in_ch), (0, 0)))
        # Pre-bake banded weight slabs + lane-tiled biases for the fused kernel.
        self.kernel_params = {
            "t1": conv3x3_to_band_matrix(w1, width),
            "b1": jnp.tile(self.params["conv1_b"], width)[None, :],
            "t2": conv3x3_to_band_matrix(self.params["conv2_w"], width),
            "b2": jnp.tile(self.params["conv2_b"], width)[None, :],
        }
        self.topographic_layer_names = ("conv1", "conv2")
        self.inverse_distance = inverse_distance(
            OrderedDict([("conv1", mid_ch), ("conv2", out_ch)]), dimension)
        self.activations = OrderedDict()

    def forward(self, x_nchw):
        assert x_nchw.shape[2] == self.height and x_nchw.shape[3] == self.width
        n = int(x_nchw.shape[0])
        block_b = _choose_block_b(n, target=16)   # images per grid step
        out, act1 = _topographic_forward(
            self.kernel_params, x_nchw, cin_pad=self.cin_pad, block_b=block_b)
        # Forward-hook equivalent: record each Conv2d layer's output (NCHW),
        # outside the jit boundary so only concrete arrays are stored.
        self.activations["conv1"] = act1   # Conv2d output (pre-ReLU)
        self.activations["conv2"] = out
        return out


# ----------------------------------------------------------------------------
# Pure-JAX reference (for correctness check).
# ----------------------------------------------------------------------------
def _ref_forward(x_nchw, params):
    x = jnp.transpose(x_nchw, (0, 2, 3, 1))
    dn = ("NHWC", "HWIO", "NHWC")
    a1 = jax.lax.conv_general_dilated(
        x, params["conv1_w"], (1, 1), "SAME", dimension_numbers=dn
    ) + params["conv1_b"]
    y = jnp.maximum(a1, 0.0)
    a2 = jax.lax.conv_general_dilated(
        y, params["conv2_w"], (1, 1), "SAME", dimension_numbers=dn
    ) + params["conv2_b"]
    return jnp.transpose(a2, (0, 3, 1, 2)), jnp.transpose(a1, (0, 3, 1, 2))


if __name__ == "__main__":
    key = jax.random.PRNGKey(0)
    kx, kp = jax.random.split(key)

    # PyTorch-style NCHW input: batch=2, channels=4, spatial=16x16.
    x = jax.random.normal(kx, (2, 4, 16, 16), jnp.float32)

    model = TopographicModelPallas(kp, in_ch=4, mid_ch=8, out_ch=8,
                                   height=16, width=16)
    out = model.forward(x)
    out = jax.block_until_ready(out)

    ref_out, ref_act1 = _ref_forward(x, model.params)
    assert out.shape == (2, 8, 16, 16), out.shape
    err_out = float(jnp.max(jnp.abs(out - ref_out)))
    err_a1 = float(jnp.max(jnp.abs(model.activations["conv1"] - ref_act1)))
    assert err_out < 1e-4, err_out
    assert err_a1 < 1e-4, err_a1
    # Sanity on the registered buffers / hooks (construction-time behavior).
    assert model.inverse_distance["conv1"].shape == (8, 8)
    assert tuple(model.activations.keys()) == ("conv1", "conv2")

    print("KERNEL_OK")
</pallas_src>

<mosaic_0001>
module attributes {stable_mosaic.version = 11 : i64} {
  func.func @_fused_topo_cnn_kernel(%arg0: i32, %arg1: memref<1x32x128xf32, #tpu.memory_space<vmem>>, %arg2: memref<384x128xf32, #tpu.memory_space<vmem>>, %arg3: memref<1x128xf32, #tpu.memory_space<vmem>>, %arg4: memref<384x128xf32, #tpu.memory_space<vmem>>, %arg5: memref<1x128xf32, #tpu.memory_space<vmem>>, %arg6: memref<1x32x128xf32, #tpu.memory_space<vmem>>, %arg7: memref<1x32x128xf32, #tpu.memory_space<vmem>>) attributes {dimension_semantics = [#tpu.dimension_semantics<parallel>], iteration_bounds = array<i64: 1>, scalar_prefetch = 0 : i64, scratch_operands = 0 : i64, tpu.core_type = #tpu.core_type<tc>, window_params = [{transform_indices = @transform_0, window_bounds = array<i64: 1, 32, 128>}, {pipeline_mode = #tpu.pipeline_mode<synchronous>, transform_indices = @transform_1, window_bounds = array<i64: 384, 128>}, {pipeline_mode = #tpu.pipeline_mode<synchronous>, transform_indices = @transform_2, window_bounds = array<i64: 1, 128>}, {pipeline_mode = #tpu.pipeline_mode<synchronous>, transform_indices = @transform_3, window_bounds = array<i64: 384, 128>}, {pipeline_mode = #tpu.pipeline_mode<synchronous>, transform_indices = @transform_4, window_bounds = array<i64: 1, 128>}, {transform_indices = @transform_5, window_bounds = array<i64: 1, 32, 128>}, {transform_indices = @transform_6, window_bounds = array<i64: 1, 32, 128>}]} {
    %c0 = arith.constant 0 : index
    %c0_0 = arith.constant 0 : index
    %c0_1 = arith.constant 0 : index
    %0 = vector.load %arg1[%c0, %c0_0, %c0_1] : memref<1x32x128xf32, #tpu.memory_space<vmem>>, vector<1x32x128xf32>
    %1 = vector.shape_cast %0 : vector<1x32x128xf32> to vector<32x128xf32>
    %2 = tpu.iota {dimensions = array<i32: 0>} : vector<32x128xi32>
    %c16_i32 = arith.constant 16 : i32
    %c0_i32 = arith.constant 0 : i32
    %3 = arith.cmpi eq, %c16_i32, %c0_i32 : i32
    %c1_i32 = arith.constant 1 : i32
    %4 = arith.select %3, %c1_i32, %c16_i32 : i32
    %5 = vector.broadcast %4 : i32 to vector<32x128xi32>
    %6 = arith.remsi %2, %5 : vector<32x128xi32>
    %c0_i32_2 = arith.constant 0 : i32
    %7 = vector.broadcast %c0_i32_2 : i32 to vector<32x128xi32>
    %8 = arith.cmpi ne, %6, %7 : vector<32x128xi32>
    %c0_i32_3 = arith.constant 0 : i32
    %9 = vector.broadcast %c0_i32_3 : i32 to vector<32x128xi32>
    %10 = arith.cmpi slt, %6, %9 : vector<32x128xi32>
    %c0_i32_4 = arith.constant 0 : i32
    %11 = arith.cmpi slt, %4, %c0_i32_4 : i32
    %12 = vector.broadcast %11 : i1 to vector<32x128xi1>
    %13 = vector.broadcast %12 : vector<32x128xi1> to vector<32x128xi1>
    %14 = arith.xori %10, %13 : vector<32x128xi1>
    %15 = arith.andi %14, %8 : vector<32x128xi1>
    %16 = vector.broadcast %4 : i32 to vector<32x128xi32>
    %17 = arith.addi %6, %16 : vector<32x128xi32>
    %18 = arith.select %15, %17, %6 : vector<32x128xi1>, vector<32x128xi32>
    %c0_i32_5 = arith.constant 0 : i32
    %19 = vector.broadcast %c0_i32_5 : i32 to vector<32x128xi32>
    %20 = arith.cmpi eq, %18, %19 : vector<32x128xi32>
    %c1_i32_6 = arith.constant 1 : i32
    %21 = tpu.dynamic_rotate %1 by %c1_i32_6 dim 0 : vector<32x128xf32>, i32 -> vector<32x128xf32>
    %cst = arith.constant 0.000000e+00 : f32
    %22 = vector.broadcast %cst : f32 to vector<32x128xf32>
    %23 = arith.select %20, %22, %21 : vector<32x128xi1>, vector<32x128xf32>
    %c15_i32 = arith.constant 15 : i32
    %24 = vector.broadcast %c15_i32 : i32 to vector<32x128xi32>
    %25 = arith.cmpi eq, %18, %24 : vector<32x128xi32>
    %c31_i32 = arith.constant 31 : i32
    %26 = tpu.dynamic_rotate %1 by %c31_i32 dim 0 : vector<32x128xf32>, i32 -> vector<32x128xf32>
    %cst_7 = arith.constant 0.000000e+00 : f32
    %27 = vector.broadcast %cst_7 : f32 to vector<32x128xf32>
    %28 = arith.select %25, %27, %26 : vector<32x128xi1>, vector<32x128xf32>
    %29 = tpu.concatenate %23, %1, %28 in 1 : vector<32x128xf32>, vector<32x128xf32>, vector<32x128xf32> -> vector<32x384xf32>
    %c0_8 = arith.constant 0 : index
    %c0_9 = arith.constant 0 : index
    %30 = vector.load %arg2[%c0_8, %c0_9] : memref<384x128xf32, #tpu.memory_space<vmem>>, vector<384x128xf32>
    %cst_10 = arith.constant dense<0.000000e+00> : vector<32x128xf32>
    %31 = tpu.matmul %29, %30, %cst_10 {dimension_numbers = #tpu.dot_dimension_numbers<[1], [0], [0], [1], [0, 0, 1, 1], [], []>} : vector<32x384xf32>, vector<384x128xf32>, vector<32x128xf32> -> vector<32x128xf32>
    %c0_11 = arith.constant 0 : index
    %c0_12 = arith.constant 0 : index
    %32 = vector.load %arg3[%c0_11, %c0_12] : memref<1x128xf32, #tpu.memory_space<vmem>>, vector<1x128xf32>
    %33 = vector.broadcast %32 : vector<1x128xf32> to vector<32x128xf32>
    %34 = arith.addf %31, %33 : vector<32x128xf32>
    %c0_13 = arith.constant 0 : index
    %c0_14 = arith.constant 0 : index
    %c0_15 = arith.constant 0 : index
    %35 = vector.load %arg6[%c0_13, %c0_14, %c0_15] : memref<1x32x128xf32, #tpu.memory_space<vmem>>, vector<1x32x128xf32>
    %36 = vector.shape_cast %35 : vector<1x32x128xf32> to vector<32x128xf32>
    %37 = vector.shape_cast %34 : vector<32x128xf32> to vector<1x32x128xf32>
    tpu.vector_store %arg6[%c0_13, %c0_14, %c0_15], %37 {strides = array<i32>} : memref<1x32x128xf32, #tpu.memory_space<vmem>>, vector<1x32x128xf32>,
    %cst_16 = arith.constant 0.000000e+00 : f32
    %38 = vector.broadcast %cst_16 : f32 to vector<32x128xf32>
    %39 = arith.maximumf %34, %38 : vector<32x128xf32>
    %40 = tpu.iota {dimensions = array<i32: 0>} : vector<32x128xi32>
    %c16_i32_17 = arith.constant 16 : i32
    %c0_i32_18 = arith.constant 0 : i32
    %41 = arith.cmpi eq, %c16_i32_17, %c0_i32_18 : i32
    %c1_i32_19 = arith.constant 1 : i32
    %42 = arith.select %41, %c1_i32_19, %c16_i32_17 : i32
    %43 = vector.broadcast %42 : i32 to vector<32x128xi32>
    %44 = arith.remsi %40, %43 : vector<32x128xi32>
    %c0_i32_20 = arith.constant 0 : i32
    %45 = vector.broadcast %c0_i32_20 : i32 to vector<32x128xi32>
    %46 = arith.cmpi ne, %44, %45 : vector<32x128xi32>
    %c0_i32_21 = arith.constant 0 : i32
    %47 = vector.broadcast %c0_i32_21 : i32 to vector<32x128xi32>
    %48 = arith.cmpi slt, %44, %47 : vector<32x128xi32>
    %c0_i32_22 = arith.constant 0 : i32
    %49 = arith.cmpi slt, %42, %c0_i32_22 : i32
    %50 = vector.broadcast %49 : i1 to vector<32x128xi1>
    %51 = vector.broadcast %50 : vector<32x128xi1> to vector<32x128xi1>
    %52 = arith.xori %48, %51 : vector<32x128xi1>
    %53 = arith.andi %52, %46 : vector<32x128xi1>
    %54 = vector.broadcast %42 : i32 to vector<32x128xi32>
    %55 = arith.addi %44, %54 : vector<32x128xi32>
    %56 = arith.select %53, %55, %44 : vector<32x128xi1>, vector<32x128xi32>
    %c0_i32_23 = arith.constant 0 : i32
    %57 = vector.broadcast %c0_i32_23 : i32 to vector<32x128xi32>
    %58 = arith.cmpi eq, %56, %57 : vector<32x128xi32>
    %c1_i32_24 = arith.constant 1 : i32
    %59 = tpu.dynamic_rotate %39 by %c1_i32_24 dim 0 : vector<32x128xf32>, i32 -> vector<32x128xf32>
    %cst_25 = arith.constant 0.000000e+00 : f32
    %60 = vector.broadcast %cst_25 : f32 to vector<32x128xf32>
    %61 = arith.select %58, %60, %59 : vector<32x128xi1>, vector<32x128xf32>
    %c15_i32_26 = arith.constant 15 : i32
    %62 = vector.broadcast %c15_i32_26 : i32 to vector<32x128xi32>
    %63 = arith.cmpi eq, %56, %62 : vector<32x128xi32>
    %c31_i32_27 = arith.constant 31 : i32
    %64 = tpu.dynamic_rotate %39 by %c31_i32_27 dim 0 : vector<32x128xf32>, i32 -> vector<32x128xf32>
    %cst_28 = arith.constant 0.000000e+00 : f32
    %65 = vector.broadcast %cst_28 : f32 to vector<32x128xf32>
    %66 = arith.select %63, %65, %64 : vector<32x128xi1>, vector<32x128xf32>
    %67 = tpu.concatenate %61, %39, %66 in 1 : vector<32x128xf32>, vector<32x128xf32>, vector<32x128xf32> -> vector<32x384xf32>
    %c0_29 = arith.constant 0 : index
    %c0_30 = arith.constant 0 : index
    %68 = vector.load %arg4[%c0_29, %c0_30] : memref<384x128xf32, #tpu.memory_space<vmem>>, vector<384x128xf32>
    %cst_31 = arith.constant dense<0.000000e+00> : vector<32x128xf32>
    %69 = tpu.matmul %67, %68, %cst_31 {dimension_numbers = #tpu.dot_dimension_numbers<[1], [0], [0], [1], [0, 0, 1, 1], [], []>} : vector<32x384xf32>, vector<384x128xf32>, vector<32x128xf32> -> vector<32x128xf32>
    %c0_32 = arith.constant 0 : index
    %c0_33 = arith.constant 0 : index
    %70 = vector.load %arg5[%c0_32, %c0_33] : memref<1x128xf32, #tpu.memory_space<vmem>>, vector<1x128xf32>
    %71 = vector.broadcast %70 : vector<1x128xf32> to vector<32x128xf32>
    %72 = arith.addf %69, %71 : vector<32x128xf32>
    %c0_34 = arith.constant 0 : index
    %c0_35 = arith.constant 0 : index
    %c0_36 = arith.constant 0 : index
    %73 = vector.load %arg7[%c0_34, %c0_35, %c0_36] : memref<1x32x128xf32, #tpu.memory_space<vmem>>, vector<1x32x128xf32>
    %74 = vector.shape_cast %73 : vector<1x32x128xf32> to vector<32x128xf32>
    %75 = vector.shape_cast %72 : vector<32x128xf32> to vector<1x32x128xf32>
    tpu.vector_store %arg7[%c0_34, %c0_35, %c0_36], %75 {strides = array<i32>} : memref<1x32x128xf32, #tpu.memory_space<vmem>>, vector<1x32x128xf32>,
    return
  }
  func.func @transform_0(%arg0: i32) -> (i32, i32, i32) {
    %c0_i32 = arith.constant 0 : i32
    %c0_i32_0 = arith.constant 0 : i32
    %c0_i32_1 = arith.constant 0 : i32
    return %arg0, %c0_i32, %c0_i32_0 : i32, i32, i32
  }
  func.func @transform_1(%arg0: i32) -> (i32, i32) {
    %c0_i32 = arith.constant 0 : i32
    %c0_i32_0 = arith.constant 0 : i32
    %c0_i32_1 = arith.constant 0 : i32
    return %c0_i32, %c0_i32_0 : i32, i32
  }
  func.func @transform_2(%arg0: i32) -> (i32, i32) {
    %c0_i32 = arith.constant 0 : i32
    %c0_i32_0 = arith.constant 0 : i32
    %c0_i32_1 = arith.constant 0 : i32
    return %c0_i32, %c0_i32_0 : i32, i32
  }
  func.func @transform_3(%arg0: i32) -> (i32, i32) {
    %c0_i32 = arith.constant 0 : i32
    %c0_i32_0 = arith.constant 0 : i32
    %c0_i32_1 = arith.constant 0 : i32
    return %c0_i32, %c0_i32_0 : i32, i32
  }
  func.func @transform_4(%arg0: i32) -> (i32, i32) {
    %c0_i32 = arith.constant 0 : i32
    %c0_i32_0 = arith.constant 0 : i32
    %c0_i32_1 = arith.constant 0 : i32
    return %c0_i32, %c0_i32_0 : i32, i32
  }
  func.func @transform_5(%arg0: i32) -> (i32, i32, i32) {
    %c0_i32 = arith.constant 0 : i32
    %c0_i32_0 = arith.constant 0 : i32
    %c0_i32_1 = arith.constant 0 : i32
    return %arg0, %c0_i32, %c0_i32_0 : i32, i32, i32
  }
  func.func @transform_6(%arg0: i32) -> (i32, i32, i32) {
    %c0_i32 = arith.constant 0 : i32
    %c0_i32_0 = arith.constant 0 : i32
    %c0_i32_1 = arith.constant 0 : i32
    return %arg0, %c0_i32, %c0_i32_0 : i32, i32, i32
  }
}

</mosaic_0001>

<llo_original>
// kernel: _topographic_forward.1
$region0: #{_topographic_forward.1}
  #allocation0 [shape = 'u32[]', space=smem, size = 0x4, offset = 0x4, fixed_abs, tag = 'smem constant byte address 0x4 - core index']
  #allocation1 [shape = 'u32[144,128]{1,0:T(1,128)}', space=vmem, size = 0x12000, scoped, tag = 'internal scratch']
  %s0 = inlined_call_operand.vmem [shape: f32[1,32,128], index: 0, kind: input, shape index: {}]
  %s1 = inlined_call_operand.vmem [shape: f32[384,128], index: 1, kind: input, shape index: {}]
  %s2 = inlined_call_operand.vmem [shape: f32[1,128], index: 2, kind: input, shape index: {}]
  %s3 = inlined_call_operand.vmem [shape: f32[384,128], index: 3, kind: input, shape index: {}]
  %s4 = inlined_call_operand.vmem [shape: f32[1,128], index: 4, kind: input, shape index: {}]
  %s5 = inlined_call_operand.vmem [shape: f32[1,32,128], index: 5, kind: output, shape index: {0}]
  %s6 = inlined_call_operand.vmem [shape: f32[1,32,128], index: 6, kind: output, shape index: {1}]
  %7 = xla_tuple %s5, %s6
  %s8 = sld [smem:[#allocation0]]
  $region38: #{_topographic_forward.1} parent=0
    _
  %s10 = ssub.s32 1, %s8
  %s11 = scalar_select 0, %s10, %s8
  // Predicated region
  $region2: #{_topographic_forward.1} parent=0 // pred_check
    _
  $region3: #{_topographic_forward.1} parent=0 // pred_check_branch
    %13 = sbr.rel (0) target = $region5
  $region4: #{_topographic_forward.1} parent=0 // pred_region
    _
  $region5: #{_topographic_forward.1} parent=0 // pred_fallthru
    _
  // Predicated region
  $region6: #{_topographic_forward.1} parent=0 // pred_check
    _
  $region7: #{_topographic_forward.1} parent=0 // pred_check_branch
    %15 = sbr.rel (0) target = $region9
  $region8: #{_topographic_forward.1} parent=0 // pred_region
    _
  $region9: #{_topographic_forward.1} parent=0 // pred_fallthru
    _
  // Predicated region
  $region10: #{_topographic_forward.1} parent=0 // pred_check
    _
  $region11: #{_topographic_forward.1} parent=0 // pred_check_branch
    %17 = sbr.rel (0) target = $region13
  $region12: #{_topographic_forward.1} parent=0 // pred_region
    _
  $region13: #{_topographic_forward.1} parent=0 // pred_fallthru
    _
  // Predicated region
  $region14: #{_topographic_forward.1} parent=0 // pred_check
    _
  $region15: #{_topographic_forward.1} parent=0 // pred_check_branch
    %19 = sbr.rel (0) target = $region17
  $region16: #{_topographic_forward.1} parent=0 // pred_region
    _
  $region17: #{_topographic_forward.1} parent=0 // pred_fallthru
    _
  // Predicated region
  $region18: #{_topographic_forward.1} parent=0 // pred_check
    _
  $region19: #{_topographic_forward.1} parent=0 // pred_check_branch
    %21 = sbr.rel (0) target = $region21
  $region20: #{_topographic_forward.1} parent=0 // pred_region
    _
  $region21: #{_topographic_forward.1} parent=0 // pred_fallthru
    _
  %v22 = vld [vmem:[%s0] sm:$0xff]
  %v23 = vld [vmem:[%s0 + $0x8] sm:$0xff]
  %v24 = vld [vmem:[%s0 + $0x10] sm:$0xff]
  %v25 = vld [vmem:[%s0 + $0x18] sm:$0xff]
  %v26 = vlaneseq
  %v27 = vshrl.u32 %v26, 7
  %v28 = vadd.s32 %v27, 8
  %v29 = vadd.s32 %v27, 16
  %v30 = vadd.s32 %v27, 24
  %vm31 = vcmp.lt.s32.totalorder %v27, 0
  %v32 = vsub.s32 0, %v27
  %v33 = vsel %vm31, %v32, %v27
  %v34 = vshrl.u32 %v33, 4
  %v35 = vand.u32 %v33, 15
  %v36 = vsub.s32 0, %v35
  %v37 = vsel %vm31, %v36, %v35
  %vm38 = vcmp.lt.s32.totalorder %v28, 0
  %v39 = vsub.s32 0, %v28
  %v40 = vsel %vm38, %v39, %v28
  %v41 = vshrl.u32 %v40, 4
  %v42 = vand.u32 %v40, 15
  %v43 = vsub.s32 0, %v42
  %v44 = vsel %vm38, %v43, %v42
  %vm45 = vcmp.lt.s32.totalorder %v29, 0
  %v46 = vsub.s32 0, %v29
  %v47 = vsel %vm45, %v46, %v29
  %v48 = vshrl.u32 %v47, 4
  %v49 = vand.u32 %v47, 15
  %v50 = vsub.s32 0, %v49
  %v51 = vsel %vm45, %v50, %v49
  %vm52 = vcmp.lt.s32.totalorder %v30, 0
  %v53 = vsub.s32 0, %v30
  %v54 = vsel %vm52, %v53, %v30
  %v55 = vshrl.u32 %v54, 4
  %v56 = vand.u32 %v54, 15
  %v57 = vsub.s32 0, %v56
  %v58 = vsel %vm52, %v57, %v56
  %vm59 = vcmp.ne.s32.totalorder %v37, 0
  %vm60 = vcmp.ne.s32.totalorder %v44, 0
  %vm61 = vcmp.ne.s32.totalorder %v51, 0
  %vm62 = vcmp.ne.s32.totalorder %v58, 0
  %vm63 = vcmp.lt.s32.totalorder %v37, 0
  %vm64 = vcmp.lt.s32.totalorder %v44, 0
  %vm65 = vcmp.lt.s32.totalorder %v51, 0
  %vm66 = vcmp.lt.s32.totalorder %v58, 0
  %vm67 = vmand %vm63, %vm59
  %vm68 = vmand %vm64, %vm60
  %vm69 = vmand %vm65, %vm61
  %vm70 = vmand %vm66, %vm62
  %v71 = vadd.s32 %v37, 16
  %v72 = vadd.s32 %v44, 16
  %v73 = vadd.s32 %v51, 16
  %v74 = vadd.s32 %v58, 16
  %v75 = vsel %vm67, %v71, %v37
  %v76 = vsel %vm68, %v72, %v44
  %v77 = vsel %vm69, %v73, %v51
  %v78 = vsel %vm70, %v74, %v58
  %vm79 = vcmp.eq.s32.totalorder %v75, 0
  %vm80 = vcmp.eq.s32.totalorder %v76, 0
  %vm81 = vcmp.eq.s32.totalorder %v77, 0
  %vm82 = vcmp.eq.s32.totalorder %v78, 0
  %v83 = vrot.slane %v22, 7
  %v84 = vrot.slane %v23, 7
  %v85 = vrot.slane %v24, 7
  %v86 = vrot.slane %v25, 7
  %vm87 = vcmp.lt.s32.totalorder %v27, 1
  %v88 = vsel %vm87, %v85, %v86
  %v89 = vsel %vm87, %v84, %v85
  %v90 = vsel %vm87, %v83, %v84
  %v91 = vsel %vm87, %v86, %v83
  %v92 = vsel %vm79, 0.0, %v91
  %v93 = vsel %vm80, 0.0, %v90
  %v94 = vsel %vm81, 0.0, %v89
  %v95 = vsel %vm82, 0.0, %v88
  %vm96 = vcmp.eq.s32.totalorder %v75, 15
  %vm97 = vcmp.eq.s32.totalorder %v76, 15
  %vm98 = vcmp.eq.s32.totalorder %v77, 15
  %vm99 = vcmp.eq.s32.totalorder %v78, 15
  %v100 = vrot.slane %v22, 1
  %v101 = vrot.slane %v23, 1
  %v102 = vrot.slane %v24, 1
  %v103 = vrot.slane %v25, 1
  %vm104 = vcmp.lt.s32.totalorder %v27, 7
  %v105 = vsel %vm104, %v102, %v103
  %v106 = vsel %vm104, %v101, %v102
  %v107 = vsel %vm104, %v100, %v101
  %v108 = vsel %vm104, %v103, %v100
  %v109 = vsel %vm96, 0.0, %v107
  %v110 = vsel %vm97, 0.0, %v106
  %v111 = vsel %vm98, 0.0, %v105
  %v112 = vsel %vm99, 0.0, %v108
  %v113 = vld [vmem:[%s1] sm:$0xff]
  %v114 = vld [vmem:[%s1 + $0x8] sm:$0xff]
  %v115 = vld [vmem:[%s1 + $0x10] sm:$0xff]
  %v116 = vld [vmem:[%s1 + $0x18] sm:$0xff]
  %v117 = vld [vmem:[%s1 + $0x20] sm:$0xff]
  %v118 = vld [vmem:[%s1 + $0x28] sm:$0xff]
  %v119 = vld [vmem:[%s1 + $0x30] sm:$0xff]
  %v120 = vld [vmem:[%s1 + $0x38] sm:$0xff]
  %v121 = vld [vmem:[%s1 + $0x40] sm:$0xff]
  %v122 = vld [vmem:[%s1 + $0x48] sm:$0xff]
  %v123 = vld [vmem:[%s1 + $0x50] sm:$0xff]
  %v124 = vld [vmem:[%s1 + $0x58] sm:$0xff]
  %v125 = vld [vmem:[%s1 + $0x60] sm:$0xff]
  %v126 = vld [vmem:[%s1 + $0x68] sm:$0xff]
  %v127 = vld [vmem:[%s1 + $0x70] sm:$0xff]
  %v128 = vld [vmem:[%s1 + $0x78] sm:$0xff]
  %v129 = vld [vmem:[%s1 + $0x80] sm:$0xff]
  %v130 = vld [vmem:[%s1 + $0x88] sm:$0xff]
  %v131 = vld [vmem:[%s1 + $0x90] sm:$0xff]
  %v132 = vld [vmem:[%s1 + $0x98] sm:$0xff]
  %v133 = vld [vmem:[%s1 + $0xa0] sm:$0xff]
  %v134 = vld [vmem:[%s1 + $0xa8] sm:$0xff]
  %v135 = vld [vmem:[%s1 + $0xb0] sm:$0xff]
  %v136 = vld [vmem:[%s1 + $0xb8] sm:$0xff]
  %v137 = vld [vmem:[%s1 + $0xc0] sm:$0xff]
  %v138 = vld [vmem:[%s1 + $0xc8] sm:$0xff]
  %v139 = vld [vmem:[%s1 + $0xd0] sm:$0xff]
  %v140 = vld [vmem:[%s1 + $0xd8] sm:$0xff]
  %v141 = vld [vmem:[%s1 + $0xe0] sm:$0xff]
  %v142 = vld [vmem:[%s1 + $0xe8] sm:$0xff]
  %v143 = vld [vmem:[%s1 + $0xf0] sm:$0xff]
  %v144 = vld [vmem:[%s1 + $0xf8] sm:$0xff]
  %v145 = vld [vmem:[%s1 + $0x100] sm:$0xff]
  %v146 = vld [vmem:[%s1 + $0x108] sm:$0xff]
  %v147 = vld [vmem:[%s1 + $0x110] sm:$0xff]
  %v148 = vld [vmem:[%s1 + $0x118] sm:$0xff]
  %v149 = vld [vmem:[%s1 + $0x120] sm:$0xff]
  %v150 = vld [vmem:[%s1 + $0x128] sm:$0xff]
  %v151 = vld [vmem:[%s1 + $0x130] sm:$0xff]
  %v152 = vld [vmem:[%s1 + $0x138] sm:$0xff]
  %v153 = vld [vmem:[%s1 + $0x140] sm:$0xff]
  %v154 = vld [vmem:[%s1 + $0x148] sm:$0xff]
  %v155 = vld [vmem:[%s1 + $0x150] sm:$0xff]
  %v156 = vld [vmem:[%s1 + $0x158] sm:$0xff]
  %v157 = vld [vmem:[%s1 + $0x160] sm:$0xff]
  %v158 = vld [vmem:[%s1 + $0x168] sm:$0xff]
  %v159 = vld [vmem:[%s1 + $0x170] sm:$0xff]
  %v160 = vld [vmem:[%s1 + $0x178] sm:$0xff]
  %v161 = vld [vmem:[%s2] sm:$0x1]
  %v163 = vlaneseq
  %v164 = vshrl.u32 %v163, 7
  %v165 = vsub.s32 0, %v164
  %v166 = vrot.slane %v161, %v165
  %168 = vmatprep.subr.mxu0 0.0
  %169 = vmatpush1.msra.mxu0 %v128
  %170 = vmatprep.subr.mxu0 0.0
  %171 = vmatpush1.msra.mxu0 %v127
  %172 = vmatprep.subr.mxu0 0.0
  %173 = vmatpush1.msra.mxu0 %v126
  %174 = vmatprep.subr.mxu0 0.0
  %175 = vmatpush1.msra.mxu0 %v125
  %176 = vmatprep.subr.mxu0 0.0
  %177 = vmatpush1.msra.mxu0 %v124
  %178 = vmatprep.subr.mxu0 0.0
  %179 = vmatpush1.msra.mxu0 %v123
  %180 = vmatprep.subr.mxu0 0.0
  %181 = vmatpush1.msra.mxu0 %v122
  %182 = vmatprep.subr.mxu0 0.0
  %183 = vmatpush1.msra.mxu0 %v121
  %184 = vmatprep.subr.mxu0 0.0
  %185 = vmatpush1.msra.mxu0 %v120
  %186 = vmatprep.subr.mxu0 0.0
  %187 = vmatpush1.msra.mxu0 %v119
  %188 = vmatprep.subr.mxu0 0.0
  %189 = vmatpush1.msra.mxu0 %v118
  %190 = vmatprep.subr.mxu0 0.0
  %191 = vmatpush1.msra.mxu0 %v117
  %192 = vmatprep.subr.mxu0 0.0
  %193 = vmatpush1.msra.mxu0 %v116
  %194 = vmatprep.subr.mxu0 0.0
  %195 = vmatpush1.msra.mxu0 %v115
  %196 = vmatprep.subr.mxu0 0.0
  %197 = vmatpush1.msra.mxu0 %v114
  %198 = vmatprep.subr.mxu0 0.0
  %199 = vmatpush1.msra.mxu0 %v113
  %200 = vmatprep.subr.mxu0 0.0
  %201 = vmatpush2.msra.mxu0 %v144
  %202 = vmatprep.subr.mxu0 0.0
  %203 = vmatpush2.msra.mxu0 %v143
  %204 = vmatprep.subr.mxu0 0.0
  %205 = vmatpush2.msra.mxu0 %v142
  %206 = vmatprep.subr.mxu0 0.0
  %207 = vmatpush2.msra.mxu0 %v141
  %208 = vmatprep.subr.mxu0 0.0
  %209 = vmatpush2.msra.mxu0 %v140
  %210 = vmatprep.subr.mxu0 0.0
  %211 = vmatpush2.msra.mxu0 %v139
  %212 = vmatprep.subr.mxu0 0.0
  %213 = vmatpush2.msra.mxu0 %v138
  %214 = vmatprep.subr.mxu0 0.0
  %215 = vmatpush2.msra.mxu0 %v137
  %216 = vmatprep.subr.mxu0 0.0
  %217 = vmatpush2.msra.mxu0 %v136
  %218 = vmatprep.subr.mxu0 0.0
  %219 = vmatpush2.msra.mxu0 %v135
  %220 = vmatprep.subr.mxu0 0.0
  %221 = vmatpush2.msra.mxu0 %v134
  %222 = vmatprep.subr.mxu0 0.0
  %223 = vmatpush2.msra.mxu0 %v133
  %224 = vmatprep.subr.mxu0 0.0
  %225 = vmatpush2.msra.mxu0 %v132
  %226 = vmatprep.subr.mxu0 0.0
  %227 = vmatpush2.msra.mxu0 %v131
  %228 = vmatprep.subr.mxu0 0.0
  %229 = vmatpush2.msra.mxu0 %v130
  %230 = vmatprep.subr.mxu0 0.0
  %231 = vmatpush2.msra.mxu0 %v129
  %232 = vmatprep.mubr.f32.mxu0 %v22
  %233 = vmatmul.mubr.f32.gmra.mxu0 %v92
  %v234 = vpop.f32.mrf.mxu0
  %v235 = vadd.f32 %v166, %v234
  %v236 = vpop.f32.mrf.mxu0
  %237 = vmatprep.mubr.f32.mxu0 %v23
  %238 = vmatmul.mubr.f32.gmra.mxu0 %v93
  %v239 = vpop.f32.mrf.mxu0
  %v240 = vadd.f32 %v166, %v239
  %v241 = vpop.f32.mrf.mxu0
  %242 = vmatprep.mubr.f32.mxu0 %v24
  %243 = vmatmul.mubr.f32.gmra.mxu0 %v94
  %v244 = vpop.f32.mrf.mxu0
  %v245 = vadd.f32 %v166, %v244
  %v246 = vpop.f32.mrf.mxu0
  %247 = vmatprep.mubr.f32.mxu0 %v25
  %248 = vmatmul.mubr.f32.gmra.mxu0 %v95
  %v249 = vpop.f32.mrf.mxu0
  %v250 = vadd.f32 %v166, %v249
  %v251 = vpop.f32.mrf.mxu0
  %252 = vdwg.mxu0
  %253 = vmatprep.subr.mxu0 0.0
  %254 = vmatpush1.msra.mxu0 %v160
  %255 = vmatprep.subr.mxu0 0.0
  %256 = vmatpush1.msra.mxu0 %v159
  %257 = vmatprep.subr.mxu0 0.0
  %258 = vmatpush1.msra.mxu0 %v158
  %259 = vmatprep.subr.mxu0 0.0
  %260 = vmatpush1.msra.mxu0 %v157
  %261 = vmatprep.subr.mxu0 0.0
  %262 = vmatpush1.msra.mxu0 %v156
  %263 = vmatprep.subr.mxu0 0.0
  %264 = vmatpush1.msra.mxu0 %v155
  %265 = vmatprep.subr.mxu0 0.0
  %266 = vmatpush1.msra.mxu0 %v154
  %267 = vmatprep.subr.mxu0 0.0
  %268 = vmatpush1.msra.mxu0 %v153
  %269 = vmatprep.subr.mxu0 0.0
  %270 = vmatpush1.msra.mxu0 %v152
  %271 = vmatprep.subr.mxu0 0.0
  %272 = vmatpush1.msra.mxu0 %v151
  %273 = vmatprep.subr.mxu0 0.0
  %274 = vmatpush1.msra.mxu0 %v150
  %275 = vmatprep.subr.mxu0 0.0
  %276 = vmatpush1.msra.mxu0 %v149
  %277 = vmatprep.subr.mxu0 0.0
  %278 = vmatpush1.msra.mxu0 %v148
  %279 = vmatprep.subr.mxu0 0.0
  %280 = vmatpush1.msra.mxu0 %v147
  %281 = vmatprep.subr.mxu0 0.0
  %282 = vmatpush1.msra.mxu0 %v146
  %283 = vmatprep.subr.mxu0 0.0
  %284 = vmatpush1.msra.mxu0 %v145
  %285 = vmatprep.subr.mxu0 0.0
  %286 = vmatpush2.msra.mxu0 0.0
  %287 = vmatprep.subr.mxu0 0.0
  %288 = vmatpush2.msra.mxu0 0.0
  %289 = vmatprep.subr.mxu0 0.0
  %290 = vmatpush2.msra.mxu0 0.0
  %291 = vmatprep.subr.mxu0 0.0
  %292 = vmatpush2.msra.mxu0 0.0
  %293 = vmatprep.subr.mxu0 0.0
  %294 = vmatpush2.msra.mxu0 0.0
  %295 = vmatprep.subr.mxu0 0.0
  %296 = vmatpush2.msra.mxu0 0.0
  %297 = vmatprep.subr.mxu0 0.0
  %298 = vmatpush2.msra.mxu0 0.0
  %299 = vmatprep.subr.mxu0 0.0
  %300 = vmatpush2.msra.mxu0 0.0
  %301 = vmatprep.subr.mxu0 0.0
  %302 = vmatpush2.msra.mxu0 0.0
  %303 = vmatprep.subr.mxu0 0.0
  %304 = vmatpush2.msra.mxu0 0.0
  %305 = vmatprep.subr.mxu0 0.0
  %306 = vmatpush2.msra.mxu0 0.0
  %307 = vmatprep.subr.mxu0 0.0
  %308 = vmatpush2.msra.mxu0 0.0
  %309 = vmatprep.subr.mxu0 0.0
  %310 = vmatpush2.msra.mxu0 0.0
  %311 = vmatprep.subr.mxu0 0.0
  %312 = vmatpush2.msra.mxu0 0.0
  %313 = vmatprep.subr.mxu0 0.0
  %314 = vmatpush2.msra.mxu0 0.0
  %315 = vmatprep.subr.mxu0 0.0
  %316 = vmatpush2.msra.mxu0 0.0
  %317 = vmatprep.mubr.f32.mxu0 0.0
  %318 = vmatmul.mubr.f32.gmra.mxu0 %v109
  %v319 = vpop.f32.mrf.mxu0
  %v320 = vadd.f32 %v235, %v319
  %v321 = vpop.f32.mrf.mxu0
  %322 = vmatprep.mubr.f32.mxu0 0.0
  %323 = vmatmul.mubr.f32.gmra.mxu0 %v110
  %v324 = vpop.f32.mrf.mxu0
  %v325 = vadd.f32 %v240, %v324
  %v326 = vpop.f32.mrf.mxu0
  %327 = vmatprep.mubr.f32.mxu0 0.0
  %328 = vmatmul.mubr.f32.gmra.mxu0 %v111
  %v329 = vpop.f32.mrf.mxu0
  %v330 = vadd.f32 %v245, %v329
  %v331 = vpop.f32.mrf.mxu0
  %332 = vmatprep.mubr.f32.mxu0 0.0
  %333 = vmatmul.mubr.f32.gmra.mxu0 %v112
  %v334 = vpop.f32.mrf.mxu0
  %v335 = vadd.f32 %v250, %v334
  %v336 = vpop.f32.mrf.mxu0
  %337 = vdwg.mxu0
  %338 = vst [vmem:[%s5] sm:$0xff] %v320
  %339 = vst [vmem:[%s5 + $0x8] sm:$0xff] %v325
  %340 = vst [vmem:[%s5 + $0x10] sm:$0xff] %v330
  %341 = vst [vmem:[%s5 + $0x18] sm:$0xff] %v335
  %v342 = vmax.f32 %v320, 0.0
  %v343 = vmax.f32 %v325, 0.0
  %v344 = vmax.f32 %v330, 0.0
  %v345 = vmax.f32 %v335, 0.0
  %v346 = vrot.slane %v342, 7
  %v347 = vrot.slane %v343, 7
  %v348 = vrot.slane %v344, 7
  %v349 = vrot.slane %v345, 7
  %v350 = vsel %vm87, %v348, %v349
  %v351 = vsel %vm87, %v347, %v348
  %v352 = vsel %vm87, %v346, %v347
  %v353 = vsel %vm87, %v349, %v346
  %v354 = vsel %vm79, 0.0, %v353
  %v355 = vsel %vm80, 0.0, %v352
  %v356 = vsel %vm81, 0.0, %v351
  %v357 = vsel %vm82, 0.0, %v350
  %v358 = vrot.slane %v342, 1
  %v359 = vrot.slane %v343, 1
  %v360 = vrot.slane %v344, 1
  %v361 = vrot.slane %v345, 1
  %v362 = vsel %vm104, %v360, %v361
  %v363 = vsel %vm104, %v359, %v360
  %v364 = vsel %vm104, %v358, %v359
  %v365 = vsel %vm104, %v361, %v358
  %v366 = vsel %vm96, 0.0, %v364
  %v367 = vsel %vm97, 0.0, %v363
  %v368 = vsel %vm98, 0.0, %v362
  %v369 = vsel %vm99, 0.0, %v365
  %v370 = vld [vmem:[%s3] sm:$0xff]
  %v371 = vld [vmem:[%s3 + $0x8] sm:$0xff]
  %v372 = vld [vmem:[%s3 + $0x10] sm:$0xff]
  %v373 = vld [vmem:[%s3 + $0x18] sm:$0xff]
  %v374 = vld [vmem:[%s3 + $0x20] sm:$0xff]
  %v375 = vld [vmem:[%s3 + $0x28] sm:$0xff]
  %v376 = vld [vmem:[%s3 + $0x30] sm:$0xff]
  %v377 = vld [vmem:[%s3 + $0x38] sm:$0xff]
  %v378 = vld [vmem:[%s3 + $0x40] sm:$0xff]
  %v379 = vld [vmem:[%s3 + $0x48] sm:$0xff]
  %v380 = vld [vmem:[%s3 + $0x50] sm:$0xff]
  %v381 = vld [vmem:[%s3 + $0x58] sm:$0xff]
  %v382 = vld [vmem:[%s3 + $0x60] sm:$0xff]
  %v383 = vld [vmem:[%s3 + $0x68] sm:$0xff]
  %v384 = vld [vmem:[%s3 + $0x70] sm:$0xff]
  %v385 = vld [vmem:[%s3 + $0x78] sm:$0xff]
  %v386 = vld [vmem:[%s3 + $0x80] sm:$0xff]
  %v387 = vld [vmem:[%s3 + $0x88] sm:$0xff]
  %v388 = vld [vmem:[%s3 + $0x90] sm:$0xff]
  %v389 = vld [vmem:[%s3 + $0x98] sm:$0xff]
  %v390 = vld [vmem:[%s3 + $0xa0] sm:$0xff]
  %v391 = vld [vmem:[%s3 + $0xa8] sm:$0xff]
  %v392 = vld [vmem:[%s3 + $0xb0] sm:$0xff]
  %v393 = vld [vmem:[%s3 + $0xb8] sm:$0xff]
  %v394 = vld [vmem:[%s3 + $0xc0] sm:$0xff]
  %v395 = vld [vmem:[%s3 + $0xc8] sm:$0xff]
  %v396 = vld [vmem:[%s3 + $0xd0] sm:$0xff]
  %v397 = vld [vmem:[%s3 + $0xd8] sm:$0xff]
  %v398 = vld [vmem:[%s3 + $0xe0] sm:$0xff]
  %v399 = vld [vmem:[%s3 + $0xe8] sm:$0xff]
  %v400 = vld [vmem:[%s3 + $0xf0] sm:$0xff]
  %v401 = vld [vmem:[%s3 + $0xf8] sm:$0xff]
  %v402 = vld [vmem:[%s3 + $0x100] sm:$0xff]
  %v403 = vld [vmem:[%s3 + $0x108] sm:$0xff]
  %v404 = vld [vmem:[%s3 + $0x110] sm:$0xff]
  %v405 = vld [vmem:[%s3 + $0x118] sm:$0xff]
  %v406 = vld [vmem:[%s3 + $0x120] sm:$0xff]
  %v407 = vld [vmem:[%s3 + $0x128] sm:$0xff]
  %v408 = vld [vmem:[%s3 + $0x130] sm:$0xff]
  %v409 = vld [vmem:[%s3 + $0x138] sm:$0xff]
  %v410 = vld [vmem:[%s3 + $0x140] sm:$0xff]
  %v411 = vld [vmem:[%s3 + $0x148] sm:$0xff]
  %v412 = vld [vmem:[%s3 + $0x150] sm:$0xff]
  %v413 = vld [vmem:[%s3 + $0x158] sm:$0xff]
  %v414 = vld [vmem:[%s3 + $0x160] sm:$0xff]
  %v415 = vld [vmem:[%s3 + $0x168] sm:$0xff]
  %v416 = vld [vmem:[%s3 + $0x170] sm:$0xff]
  %v417 = vld [vmem:[%s3 + $0x178] sm:$0xff]
  %v418 = vld [vmem:[%s4] sm:$0x1]
  %v420 = vlaneseq
  %v421 = vshrl.u32 %v420, 7
  %v422 = vsub.s32 0, %v421
  %v423 = vrot.slane %v418, %v422
  %425 = vmatprep.subr.mxu0 0.0
  %426 = vmatpush1.msra.mxu0 %v385
  %427 = vmatprep.subr.mxu0 0.0
  %428 = vmatpush1.msra.mxu0 %v384
  %429 = vmatprep.subr.mxu0 0.0
  %430 = vmatpush1.msra.mxu0 %v383
  %431 = vmatprep.subr.mxu0 0.0
  %432 = vmatpush1.msra.mxu0 %v382
  %433 = vmatprep.subr.mxu0 0.0
  %434 = vmatpush1.msra.mxu0 %v381
  %435 = vmatprep.subr.mxu0 0.0
  %436 = vmatpush1.msra.mxu0 %v380
  %437 = vmatprep.subr.mxu0 0.0
  %438 = vmatpush1.msra.mxu0 %v379
  %439 = vmatprep.subr.mxu0 0.0
  %440 = vmatpush1.msra.mxu0 %v378
  %441 = vmatprep.subr.mxu0 0.0
  %442 = vmatpush1.msra.mxu0 %v377
  %443 = vmatprep.subr.mxu0 0.0
  %444 = vmatpush1.msra.mxu0 %v376
  %445 = vmatprep.subr.mxu0 0.0
  %446 = vmatpush1.msra.mxu0 %v375
  %447 = vmatprep.subr.mxu0 0.0
  %448 = vmatpush1.msra.mxu0 %v374
  %449 = vmatprep.subr.mxu0 0.0
  %450 = vmatpush1.msra.mxu0 %v373
  %451 = vmatprep.subr.mxu0 0.0
  %452 = vmatpush1.msra.mxu0 %v372
  %453 = vmatprep.subr.mxu0 0.0
  %454 = vmatpush1.msra.mxu0 %v371
  %455 = vmatprep.subr.mxu0 0.0
  %456 = vmatpush1.msra.mxu0 %v370
  %457 = vmatprep.subr.mxu0 0.0
  %458 = vmatpush2.msra.mxu0 %v401
  %459 = vmatprep.subr.mxu0 0.0
  %460 = vmatpush2.msra.mxu0 %v400
  %461 = vmatprep.subr.mxu0 0.0
  %462 = vmatpush2.msra.mxu0 %v399
  %463 = vmatprep.subr.mxu0 0.0
  %464 = vmatpush2.msra.mxu0 %v398
  %465 = vmatprep.subr.mxu0 0.0
  %466 = vmatpush2.msra.mxu0 %v397
  %467 = vmatprep.subr.mxu0 0.0
  %468 = vmatpush2.msra.mxu0 %v396
  %469 = vmatprep.subr.mxu0 0.0
  %470 = vmatpush2.msra.mxu0 %v395
  %471 = vmatprep.subr.mxu0 0.0
  %472 = vmatpush2.msra.mxu0 %v394
  %473 = vmatprep.subr.mxu0 0.0
  %474 = vmatpush2.msra.mxu0 %v393
  %475 = vmatprep.subr.mxu0 0.0
  %476 = vmatpush2.msra.mxu0 %v392
  %477 = vmatprep.subr.mxu0 0.0
  %478 = vmatpush2.msra.mxu0 %v391
  %479 = vmatprep.subr.mxu0 0.0
  %480 = vmatpush2.msra.mxu0 %v390
  %481 = vmatprep.subr.mxu0 0.0
  %482 = vmatpush2.msra.mxu0 %v389
  %483 = vmatprep.subr.mxu0 0.0
  %484 = vmatpush2.msra.mxu0 %v388
  %485 = vmatprep.subr.mxu0 0.0
  %486 = vmatpush2.msra.mxu0 %v387
  %487 = vmatprep.subr.mxu0 0.0
  %488 = vmatpush2.msra.mxu0 %v386
  %489 = vmatprep.mubr.f32.mxu0 %v342
  %490 = vmatmul.mubr.f32.gmra.mxu0 %v354
  %v491 = vpop.f32.mrf.mxu0
  %v492 = vadd.f32 %v423, %v491
  %v493 = vpop.f32.mrf.mxu0
  %494 = vmatprep.mubr.f32.mxu0 %v343
  %495 = vmatmul.mubr.f32.gmra.mxu0 %v355
  %v496 = vpop.f32.mrf.mxu0
  %v497 = vadd.f32 %v423, %v496
  %v498 = vpop.f32.mrf.mxu0
  %499 = vmatprep.mubr.f32.mxu0 %v344
  %500 = vmatmul.mubr.f32.gmra.mxu0 %v356
  %v501 = vpop.f32.mrf.mxu0
  %v502 = vadd.f32 %v423, %v501
  %v503 = vpop.f32.mrf.mxu0
  %504 = vmatprep.mubr.f32.mxu0 %v345
  %505 = vmatmul.mubr.f32.gmra.mxu0 %v357
  %v506 = vpop.f32.mrf.mxu0
  %v507 = vadd.f32 %v423, %v506
  %v508 = vpop.f32.mrf.mxu0
  %509 = vdwg.mxu0
  %510 = vmatprep.subr.mxu0 0.0
  %511 = vmatpush1.msra.mxu0 %v417
  %512 = vmatprep.subr.mxu0 0.0
  %513 = vmatpush1.msra.mxu0 %v416
  %514 = vmatprep.subr.mxu0 0.0
  %515 = vmatpush1.msra.mxu0 %v415
  %516 = vmatprep.subr.mxu0 0.0
  %517 = vmatpush1.msra.mxu0 %v414
  %518 = vmatprep.subr.mxu0 0.0
  %519 = vmatpush1.msra.mxu0 %v413
  %520 = vmatprep.subr.mxu0 0.0
  %521 = vmatpush1.msra.mxu0 %v412
  %522 = vmatprep.subr.mxu0 0.0
  %523 = vmatpush1.msra.mxu0 %v411
  %524 = vmatprep.subr.mxu0 0.0
  %525 = vmatpush1.msra.mxu0 %v410
  %526 = vmatprep.subr.mxu0 0.0
  %527 = vmatpush1.msra.mxu0 %v409
  %528 = vmatprep.subr.mxu0 0.0
  %529 = vmatpush1.msra.mxu0 %v408
  %530 = vmatprep.subr.mxu0 0.0
  %531 = vmatpush1.msra.mxu0 %v407
  %532 = vmatprep.subr.mxu0 0.0
  %533 = vmatpush1.msra.mxu0 %v406
  %534 = vmatprep.subr.mxu0 0.0
  %535 = vmatpush1.msra.mxu0 %v405
  %536 = vmatprep.subr.mxu0 0.0
  %537 = vmatpush1.msra.mxu0 %v404
  %538 = vmatprep.subr.mxu0 0.0
  %539 = vmatpush1.msra.mxu0 %v403
  %540 = vmatprep.subr.mxu0 0.0
  %541 = vmatpush1.msra.mxu0 %v402
  %542 = vmatprep.subr.mxu0 0.0
  %543 = vmatpush2.msra.mxu0 0.0
  %544 = vmatprep.subr.mxu0 0.0
  %545 = vmatpush2.msra.mxu0 0.0
  %546 = vmatprep.subr.mxu0 0.0
  %547 = vmatpush2.msra.mxu0 0.0
  %548 = vmatprep.subr.mxu0 0.0
  %549 = vmatpush2.msra.mxu0 0.0
  %550 = vmatprep.subr.mxu0 0.0
  %551 = vmatpush2.msra.mxu0 0.0
  %552 = vmatprep.subr.mxu0 0.0
  %553 = vmatpush2.msra.mxu0 0.0
  %554 = vmatprep.subr.mxu0 0.0
  %555 = vmatpush2.msra.mxu0 0.0
  %556 = vmatprep.subr.mxu0 0.0
  %557 = vmatpush2.msra.mxu0 0.0
  %558 = vmatprep.subr.mxu0 0.0
  %559 = vmatpush2.msra.mxu0 0.0
  %560 = vmatprep.subr.mxu0 0.0
  %561 = vmatpush2.msra.mxu0 0.0
  %562 = vmatprep.subr.mxu0 0.0
  %563 = vmatpush2.msra.mxu0 0.0
  %564 = vmatprep.subr.mxu0 0.0
  %565 = vmatpush2.msra.mxu0 0.0
  %566 = vmatprep.subr.mxu0 0.0
  %567 = vmatpush2.msra.mxu0 0.0
  %568 = vmatprep.subr.mxu0 0.0
  %569 = vmatpush2.msra.mxu0 0.0
  %570 = vmatprep.subr.mxu0 0.0
  %571 = vmatpush2.msra.mxu0 0.0
  %572 = vmatprep.subr.mxu0 0.0
  %573 = vmatpush2.msra.mxu0 0.0
  %574 = vmatprep.mubr.f32.mxu0 0.0
  %575 = vmatmul.mubr.f32.gmra.mxu0 %v366
  %v576 = vpop.f32.mrf.mxu0
  %v577 = vadd.f32 %v492, %v576
  %v578 = vpop.f32.mrf.mxu0
  %579 = vmatprep.mubr.f32.mxu0 0.0
  %580 = vmatmul.mubr.f32.gmra.mxu0 %v367
  %v581 = vpop.f32.mrf.mxu0
  %v582 = vadd.f32 %v497, %v581
  %v583 = vpop.f32.mrf.mxu0
  %584 = vmatprep.mubr.f32.mxu0 0.0
  %585 = vmatmul.mubr.f32.gmra.mxu0 %v368
  %v586 = vpop.f32.mrf.mxu0
  %v587 = vadd.f32 %v502, %v586
  %v588 = vpop.f32.mrf.mxu0
  %589 = vmatprep.mubr.f32.mxu0 0.0
  %590 = vmatmul.mubr.f32.gmra.mxu0 %v369
  %v591 = vpop.f32.mrf.mxu0
  %v592 = vadd.f32 %v507, %v591
  %v593 = vpop.f32.mrf.mxu0
  %594 = vdwg.mxu0
  %595 = vst [vmem:[%s6] sm:$0xff] %v577
  %596 = vst [vmem:[%s6 + $0x8] sm:$0xff] %v582
  %597 = vst [vmem:[%s6 + $0x10] sm:$0xff] %v587
  %598 = vst [vmem:[%s6 + $0x18] sm:$0xff] %v592
  // Predicated region
  $region22: #{_topographic_forward.1} parent=0 // pred_check
    _
  $region23: #{_topographic_forward.1} parent=0 // pred_check_branch
    %600 = sbr.rel (0) target = $region25
  $region24: #{_topographic_forward.1} parent=0 // pred_region
    _
  $region25: #{_topographic_forward.1} parent=0 // pred_fallthru
    _
  // Predicated region
  $region26: #{_topographic_forward.1} parent=0 // pred_check
    _
  $region27: #{_topographic_forward.1} parent=0 // pred_check_branch
    %602 = sbr.rel (0) target = $region29
  $region28: #{_topographic_forward.1} parent=0 // pred_region
    _
  $region29: #{_topographic_forward.1} parent=0 // pred_fallthru
    _
  // Predicated region
  $region30: #{_topographic_forward.1} parent=0 // pred_check
    _
  $region31: #{_topographic_forward.1} parent=0 // pred_check_branch
    %604 = sbr.rel (0) target = $region33
  $region32: #{_topographic_forward.1} parent=0 // pred_region
    _
  $region33: #{_topographic_forward.1} parent=0 // pred_fallthru
    _
  // Predicated region
  $region34: #{_topographic_forward.1} parent=0 // pred_check
    _
  $region35: #{_topographic_forward.1} parent=0 // pred_check_branch
    %606 = sbr.rel (0) target = $region37
  $region36: #{_topographic_forward.1} parent=0 // pred_region
    _
  $region37: #{_topographic_forward.1} parent=0 // pred_fallthru
    _

</llo_original>
